<compile_context>
chip_gen: v6e
topology: v6e:2x2x1
jax: 0.10.0
libtpu: 0.0.40
codegen_flags: <defaults>
</compile_context>

<pallas_src>
import functools

import jax
import jax.numpy as jnp
import numpy as np
from jax.experimental import pallas as pl
from jax.experimental.pallas import tpu as pltpu


# ----------------------------------------------------------------------------- kernel
def _patch_pool_kernel(info_ref, mw_ref, nwt_ref, colw_ref, x_ref, o_ref):
    """One grid step pools Cb channels over one TH-row block.

    info_ref: SMEM (2,) int32   [bbox row-block start, #valid row blocks]
    mw_ref:   (1, P, TH) f32    row-pool weights for this row block (valid-masked)
    nwt_ref:  (W, P)     x.dtype column hit-mask (exact 0/1)
    colw_ref: (1, P)     f32    per-output-column 1/n scale
    x_ref:    (Cb, TH, W) x.dtype input row-block for Cb channels
    o_ref:    (Cb, P, P) f32    resident accumulator / output
    """
    r = pl.program_id(1)

    @pl.when(r == 0)
    def _init():
        o_ref[...] = jnp.zeros_like(o_ref)

    @pl.when(r < info_ref[1])           # skip clamped (out-of-bbox) steps
    def _accumulate():
        Cb, TH, W = x_ref.shape
        P = o_ref.shape[-1]
        sub = 8 if jnp.dtype(x_ref.dtype).itemsize == 4 else 16

        if TH % sub == 0:
            # Column pooling as ONE big MXU matmul: (Cb*TH, W) @ (W, P).
            # Collapse keeps the last dim and TH is sublane-aligned -> layout-free.
            xr = x_ref[...].reshape(Cb * TH, W)
            t = jnp.dot(xr, nwt_ref[...], preferred_element_type=jnp.float32)
            t3 = t.reshape(Cb, TH, P)                                   # (Cb, TH, P) f32
        else:
            # Non-sublane-aligned TH: avoid the repack copy, use a batched matmul.
            nwb = jnp.broadcast_to(nwt_ref[...], (Cb, W, P))
            t3 = jnp.einsum("chw,cwj->chj", x_ref[...], nwb,
                            preferred_element_type=jnp.float32)

        # Row pooling as a small batched matmul; broadcast of the (1,P,TH) weights over
        # the channel batch is free VPU filler in this DMA-bound kernel.
        mwb = jnp.broadcast_to(mw_ref[...], (Cb, P, TH))
        contrib = jnp.einsum("cih,chj->cij", mwb, t3,
                             preferred_element_type=jnp.float32)        # (Cb, P, P)

        # Per-output-column 1/n scale applied in f32 (keeps bf16 inputs accurate).
        o_ref[...] += contrib * colw_ref[...]


# --------------------------------------------------------------------- weights / bbox
def _pool_weights(mask, pos, P, TH, in_dtype):
    """Bounding box of (mask == pos) + exact-integer AdaptiveAvgPool2d weights.

    Returns mw3 (nrb,P,TH) f32, nwt (W,P) in_dtype 0/1 mask, colw (1,P) f32,
    info (2,) int32 [row-block start, #valid row blocks], valid (bool scalar).
    """
    H, W = mask.shape
    nrb = H // TH
    m = mask == pos
    row_any = jnp.any(m, axis=1)
    col_any = jnp.any(m, axis=0)
    row_idx = jnp.arange(H, dtype=jnp.int32)
    col_idx = jnp.arange(W, dtype=jnp.int32)
    any_match = jnp.any(m)
    valid = jnp.logical_and(pos != -1, any_match)

    x0 = jnp.where(any_match, jnp.min(jnp.where(row_any, row_idx, H)), 0).astype(jnp.int32)
    x1 = jnp.where(any_match, jnp.max(jnp.where(row_any, row_idx, -1)) + 1, H).astype(jnp.int32)
    y0 = jnp.where(any_match, jnp.min(jnp.where(col_any, col_idx, W)), 0).astype(jnp.int32)
    y1 = jnp.where(any_match, jnp.max(jnp.where(col_any, col_idx, -1)) + 1, W).astype(jnp.int32)

    h_in = x1 - x0
    w_in = y1 - y0

    # Row-pool weights (P, H): bin i covers crop rows [floor(i*h/P), ceil((i+1)*h/P)).
    i = jnp.arange(P, dtype=jnp.int32)
    rs = (i * h_in) // P
    re = ((i + 1) * h_in + (P - 1)) // P
    crop_r = row_idx[None, :] - x0
    row_hit = (crop_r >= rs[:, None]) & (crop_r < re[:, None])            # (P, H)
    row_w = valid.astype(jnp.float32) / jnp.maximum(re - rs, 1).astype(jnp.float32)
    mw = row_hit.astype(jnp.float32) * row_w[:, None]                     # (P, H)
    mw3 = mw.reshape(P, nrb, TH).transpose(1, 0, 2)                       # (nrb, P, TH)

    # Column hit-mask (W, P), exact 0/1 in x.dtype; 1/n scale kept separate in f32.
    j = jnp.arange(P, dtype=jnp.int32)
    cs = (j * w_in) // P
    ce = ((j + 1) * w_in + (P - 1)) // P
    crop_c = col_idx[:, None] - y0
    col_hit = (crop_c >= cs[None, :]) & (crop_c < ce[None, :])            # (W, P)
    nwt = col_hit.astype(in_dtype)
    colw = (1.0 / jnp.maximum(ce - cs, 1).astype(jnp.float32))[None, :]   # (1, P)

    rb_start = x0 // TH
    rb_count = jnp.maximum((x1 + TH - 1) // TH - rb_start, 1)
    info = jnp.stack([rb_start, rb_count]).astype(jnp.int32)
    return mw3, nwt, colw, info, valid


# ------------------------------------------------------------------- sizing heuristics
def _vmem_config():
    """(budget, vmem_limit_bytes, two_tc) sized per TPU generation."""
    phys = 64 * 1024 * 1024                      # conservative default (v7x per-TC VMEM)
    try:
        phys = int(pltpu.get_tpu_info().vmem_capacity_bytes)
    except Exception:
        pass
    if phys >= 128 * 1024 * 1024:                # v5e / v6e: 1 TC, big VMEM
        budget, two_tc = 48 * 1024 * 1024, False
    else:                                        # v7x-class: 2 TCs, 64 MiB VMEM
        budget, two_tc = 24 * 1024 * 1024, True
    limit = min(phys - 8 * 1024 * 1024, budget + 16 * 1024 * 1024)
    return budget, limit, two_tc


def _choose_row_block(H, sub):
    """Largest divisor of H that is a multiple of the sublane tile and <= 128 rows
    (bbox-DMA granularity); H itself if none (no row blocking)."""
    if H % sub != 0:
        return H
    cand = [t for t in range(sub, min(H, 128) + 1, sub) if H % t == 0]
    return max(cand) if cand else H


def _choose_channel_block(C, TH, W, P, itemsize, sub, budget, two_tc):
    """Largest divisor of C whose per-step footprint (double-buffered x + output blocks,
    weight buffers, f32 intermediates) fits the budget; on 2-TC parts also keep >= 8
    channel steps so both TensorCores stay busy."""
    def pad(n, m):
        return ((n + m - 1) // m) * m
    fixed = (2 * pad(P, 8) * pad(TH, 128) * 4               # mw3 block (double-buffered)
             + 2 * pad(W, sub) * pad(P, 128) * itemsize     # nwt (double-buffered)
             + 2 * 8 * 128 * 4)                             # colw
    per_chan = (2 * pad(TH, sub) * pad(W, 128) * itemsize   # x block (double-buffered)
                + 2 * pad(P, 8) * pad(P, 128) * 4           # output block (double-buffered)
                + pad(TH, 8) * pad(P, 128) * 4              # column-pool f32 intermediate
                + 2 * pad(P, 8) * pad(P, 128) * 4)          # contrib / scaled copy
    cb_cap = max(1, (budget - fixed) // per_chan)
    if two_tc and C >= 8:
        cb_cap = min(cb_cap, max(1, C // 8))
    cb = 1
    for d in range(1, C + 1):
        if C % d == 0 and d <= cb_cap:
            cb = d
    return cb


# ------------------------------------------------------------------------------ entry
@functools.partial(jax.jit, static_argnums=(3, 4))
def patch_extractor(x, mask, pos, patch_dim, row_block=None):
    C, H, W = x.shape
    P = patch_dim
    itemsize = jnp.dtype(x.dtype).itemsize
    sub = 8 if itemsize == 4 else 16

    TH = _choose_row_block(H, sub) if row_block is None else row_block
    assert H % TH == 0 and (TH % sub == 0 or TH == H), "bad row block"
    nrb = H // TH

    budget, vmem_limit, two_tc = _vmem_config()
    Cb = _choose_channel_block(C, TH, W, P, itemsize, sub, budget, two_tc)

    mw3, nwt, colw, info, valid = _pool_weights(mask, pos, P, TH, x.dtype)

    cost = pl.CostEstimate(
        flops=2 * C * H * W * P + 2 * C * H * P * P,
        transcendentals=0,
        bytes_accessed=C * H * W * itemsize + C * P * P * 4
                       + H * P * 4 + W * P * itemsize)

    def _run(_):
        return pl.pallas_call(
            _patch_pool_kernel,
            out_shape=jax.ShapeDtypeStruct((C, P, P), jnp.float32),
            grid_spec=pltpu.PrefetchScalarGridSpec(
                num_scalar_prefetch=1,
                grid=(C // Cb, nrb),
                in_specs=[
                    # Row-pool weight block: follows the (clamped) bbox row block.
                    pl.BlockSpec(
                        (1, P, TH),
                        lambda c, r, info: (info[0] + jnp.minimum(r, info[1] - 1), 0, 0)),
                    # Column hit-mask: constant block -> DMA'd once, stays resident.
                    pl.BlockSpec((W, P), lambda c, r, info: (0, 0)),
                    # Column 1/n scale: constant block.
                    pl.BlockSpec((1, P), lambda c, r, info: (0, 0)),
                    # x: channel-batched, bbox-clamped row block (no re-DMA once clamped).
                    pl.BlockSpec(
                        (Cb, TH, W),
                        lambda c, r, info: (c, info[0] + jnp.minimum(r, info[1] - 1), 0)),
                ],
                # Output block constant across the row-block axis -> resident accumulator.
                # (Kept (Cb,P,P); a lane-dense (Cb,P*P) writeback is not worth the
                #  in-kernel repack for this tiny output.)
                out_specs=pl.BlockSpec((Cb, P, P), lambda c, r, info: (c, 0, 0)),
            ),
            compiler_params=pltpu.CompilerParams(
                dimension_semantics=("parallel", "arbitrary"),
                vmem_limit_bytes=int(vmem_limit)),
            cost_estimate=cost,
        )(info, mw3, nwt, colw, x)

    def _zeros(_):
        return jnp.zeros((C, P, P), jnp.float32)

    # Early exit: pos == -1 or pos absent from mask -> zeros, no HBM read of x.
    # TODO(synk): pos absent returns zeros instead of raising like PyTorch would.
    return jax.lax.cond(valid, _run, _zeros, 0)


# -------------------------------------------------------------------------- reference
def _reference_numpy(x, mask, pos, P):
    """Pure-numpy re-implementation of the PyTorch forward (for verification)."""
    x = np.asarray(x, np.float32)
    mask = np.asarray(mask)
    if pos == -1:
        return np.zeros((x.shape[0], P, P), np.float32)
    xs, ys = np.where(mask == pos)
    x0, x1 = xs.min(), xs.max() + 1
    y0, y1 = ys.min(), ys.max() + 1
    patch = x[:, x0:x1, y0:y1]
    C, hin, win = patch.shape
    out = np.zeros((C, P, P), np.float32)
    for i in range(P):
        rs, re = (i * hin) // P, -((-(i + 1) * hin) // P)
        for j in range(P):
            cs, ce = (j * win) // P, -((-(j + 1) * win) // P)
            out[:, i, j] = patch[:, rs:re, cs:ce].mean(axis=(1, 2))
    return out


if __name__ == "__main__":
    key = jax.random.PRNGKey(0)
    patch_dim = 4  # AdaptiveAvgPool2d((patch_dim, patch_dim)); module has no weights.

    # ---- Test 1: small plane, single row block ----------------------------------
    C, H, W = 4, 16, 16
    x = jax.random.normal(key, (C, H, W), dtype=jnp.float32)
    mask = jnp.zeros((H, W), dtype=jnp.int32)
    mask = mask.at[3:11, 5:14].set(2)   # region with id 2
    mask = mask.at[0:2, 0:3].set(1)     # region with id 1

    out = jax.block_until_ready(patch_extractor(x, mask, jnp.int32(2), patch_dim, None))
    ref = _reference_numpy(x, mask, 2, patch_dim)
    assert out.shape == (C, patch_dim, patch_dim)
    assert np.allclose(np.asarray(out), ref, atol=1e-5, rtol=1e-5)

    # pos == -1 path -> zeros (early-exited, no kernel DMA).
    out0 = jax.block_until_ready(patch_extractor(x, mask, jnp.int32(-1), patch_dim, None))
    assert np.allclose(np.asarray(out0), 0.0)

    # pos absent from mask -> zeros (deliberate difference: PyTorch would raise).
    out_absent = jax.block_until_ready(patch_extractor(x, mask, jnp.int32(7), patch_dim, None))
    assert np.allclose(np.asarray(out_absent), 0.0)

    # ---- Test 2: multi row-block path (bbox-restricted DMA, clamping, accumulation)
    key2 = jax.random.PRNGKey(1)
    C2, H2, W2 = 4, 64, 32
    x2 = jax.random.normal(key2, (C2, H2, W2), dtype=jnp.float32)
    mask2 = jnp.zeros((H2, W2), dtype=jnp.int32)
    mask2 = mask2.at[18:43, 5:28].set(3)

    out2 = jax.block_until_ready(patch_extractor(x2, mask2, jnp.int32(3), patch_dim, 8))
    ref2 = _reference_numpy(x2, mask2, 3, patch_dim)
    assert np.allclose(np.asarray(out2), ref2, atol=1e-5, rtol=1e-5)

    print("KERNEL_OK")
</pallas_src>

<mosaic_0001>
module attributes {stable_mosaic.version = 11 : i64} {
  func.func @_patch_pool_kernel(%arg0: i32, %arg1: i32, %arg2: memref<2xi32, #tpu.memory_space<smem>>, %arg3: memref<1x4x16xf32, #tpu.memory_space<vmem>>, %arg4: memref<16x4xf32, #tpu.memory_space<vmem>>, %arg5: memref<1x4xf32, #tpu.memory_space<vmem>>, %arg6: memref<4x16x16xf32, #tpu.memory_space<vmem>>, %arg7: memref<4x4x4xf32, #tpu.memory_space<vmem>>) attributes {dimension_semantics = [#tpu.dimension_semantics<parallel>, #tpu.dimension_semantics<arbitrary>], iteration_bounds = array<i64: 1, 1>, scalar_prefetch = 1 : i64, scratch_operands = 0 : i64, tpu.core_type = #tpu.core_type<tc>, window_params = [{transform_indices = @transform_0, window_bounds = array<i64: 1, 4, 16>}, {pipeline_mode = #tpu.pipeline_mode<synchronous>, transform_indices = @transform_1, window_bounds = array<i64: 16, 4>}, {pipeline_mode = #tpu.pipeline_mode<synchronous>, transform_indices = @transform_2, window_bounds = array<i64: 1, 4>}, {transform_indices = @transform_3, window_bounds = array<i64: 4, 16, 16>}, {transform_indices = @transform_4, window_bounds = array<i64: 4, 4, 4>}]} {
    %c0_i32 = arith.constant 0 : i32
    %0 = arith.cmpi eq, %arg1, %c0_i32 : i32
    %1 = arith.extui %0 : i1 to i32
    %c0_i32_0 = arith.constant 0 : i32
    %2 = arith.cmpi ne, %1, %c0_i32_0 : i32
    scf.if %2 {
      %cst = arith.constant 0.000000e+00 : f32
      %7 = vector.broadcast %cst : f32 to vector<4x4x4xf32>
      %c0 = arith.constant 0 : index
      %c0_2 = arith.constant 0 : index
      %c0_3 = arith.constant 0 : index
      %8 = vector.load %arg7[%c0, %c0_2, %c0_3] : memref<4x4x4xf32, #tpu.memory_space<vmem>>, vector<4x4x4xf32>
      tpu.vector_store %arg7[%c0, %c0_2, %c0_3], %7 {strides = array<i32>} : memref<4x4x4xf32, #tpu.memory_space<vmem>>, vector<4x4x4xf32>,
    } else {
    }
    %c1 = arith.constant 1 : index
    %3 = memref.load %arg2[%c1] : memref<2xi32, #tpu.memory_space<smem>>
    %4 = arith.cmpi slt, %arg1, %3 : i32
    %5 = arith.extui %4 : i1 to i32
    %c0_i32_1 = arith.constant 0 : i32
    %6 = arith.cmpi ne, %5, %c0_i32_1 : i32
    scf.if %6 {
      %c0 = arith.constant 0 : index
      %c0_2 = arith.constant 0 : index
      %c0_3 = arith.constant 0 : index
      %7 = vector.load %arg6[%c0, %c0_2, %c0_3] : memref<4x16x16xf32, #tpu.memory_space<vmem>>, vector<4x16x16xf32>
      %8 = vector.shape_cast %7 : vector<4x16x16xf32> to vector<64x16xf32>
      %c0_4 = arith.constant 0 : index
      %c0_5 = arith.constant 0 : index
      %9 = vector.load %arg4[%c0_4, %c0_5] : memref<16x4xf32, #tpu.memory_space<vmem>>, vector<16x4xf32>
      %cst = arith.constant dense<0.000000e+00> : vector<64x4xf32>
      %10 = tpu.matmul %8, %9, %cst {dimension_numbers = #tpu.dot_dimension_numbers<[1], [0], [0], [1], [0, 0, 1, 1], [], []>} : vector<64x16xf32>, vector<16x4xf32>, vector<64x4xf32> -> vector<64x4xf32>
      %11 = vector.shape_cast %10 : vector<64x4xf32> to vector<4x16x4xf32>
      %c0_6 = arith.constant 0 : index
      %c0_7 = arith.constant 0 : index
      %c0_8 = arith.constant 0 : index
      %12 = vector.load %arg3[%c0_6, %c0_7, %c0_8] : memref<1x4x16xf32, #tpu.memory_space<vmem>>, vector<1x4x16xf32>
      %13 = vector.shape_cast %12 : vector<1x4x16xf32> to vector<1x4x16xf32>
      %14 = vector.broadcast %13 : vector<1x4x16xf32> to vector<4x4x16xf32>
      "tpu.trace_start"() <{level = 10 : i32, message = "cih,chj->cij"}> : () -> ()
      %cst_9 = arith.constant dense<0.000000e+00> : vector<4x4x4xf32>
      %15 = tpu.matmul %14, %11, %cst_9 {dimension_numbers = #tpu.dot_dimension_numbers<[2], [1], [1], [2], [0, 0, 0, 1, 1, 2], [0], [0]>} : vector<4x4x16xf32>, vector<4x16x4xf32>, vector<4x4x4xf32> -> vector<4x4x4xf32>
      "tpu.trace_stop"() : () -> ()
      %c0_10 = arith.constant 0 : index
      %c0_11 = arith.constant 0 : index
      %c0_12 = arith.constant 0 : index
      %16 = vector.load %arg7[%c0_10, %c0_11, %c0_12] : memref<4x4x4xf32, #tpu.memory_space<vmem>>, vector<4x4x4xf32>
      %c0_13 = arith.constant 0 : index
      %c0_14 = arith.constant 0 : index
      %17 = vector.load %arg5[%c0_13, %c0_14] : memref<1x4xf32, #tpu.memory_space<vmem>>, vector<1x4xf32>
      %18 = vector.shape_cast %17 : vector<1x4xf32> to vector<1x1x4xf32>
      %19 = vector.broadcast %18 : vector<1x1x4xf32> to vector<4x4x4xf32>
      %20 = arith.mulf %15, %19 : vector<4x4x4xf32>
      %21 = arith.addf %16, %20 : vector<4x4x4xf32>
      %c0_15 = arith.constant 0 : index
      %c0_16 = arith.constant 0 : index
      %c0_17 = arith.constant 0 : index
      %22 = vector.load %arg7[%c0_15, %c0_16, %c0_17] : memref<4x4x4xf32, #tpu.memory_space<vmem>>, vector<4x4x4xf32>
      tpu.vector_store %arg7[%c0_15, %c0_16, %c0_17], %21 {strides = array<i32>} : memref<4x4x4xf32, #tpu.memory_space<vmem>>, vector<4x4x4xf32>,
    } else {
    }
    return
  }
  func.func @transform_0(%arg0: i32, %arg1: i32, %arg2: memref<2xi32, #tpu.memory_space<smem>>) -> (i32, i32, i32) {
    %c0 = arith.constant 0 : index
    %0 = memref.load %arg2[%c0] : memref<2xi32, #tpu.memory_space<smem>>
    %c1 = arith.constant 1 : index
    %1 = memref.load %arg2[%c1] : memref<2xi32, #tpu.memory_space<smem>>
    %c1_i32 = arith.constant 1 : i32
    %2 = arith.subi %1, %c1_i32 : i32
    %3 = arith.minsi %arg1, %2 : i32
    %4 = arith.addi %0, %3 : i32
    %c0_i32 = arith.constant 0 : i32
    %c0_i32_0 = arith.constant 0 : i32
    %c0_i32_1 = arith.constant 0 : i32
    return %4, %c0_i32, %c0_i32_0 : i32, i32, i32
  }
  func.func @transform_1(%arg0: i32, %arg1: i32, %arg2: memref<2xi32, #tpu.memory_space<smem>>) -> (i32, i32) {
    %c0_i32 = arith.constant 0 : i32
    %c0_i32_0 = arith.constant 0 : i32
    %c0_i32_1 = arith.constant 0 : i32
    return %c0_i32, %c0_i32_0 : i32, i32
  }
  func.func @transform_2(%arg0: i32, %arg1: i32, %arg2: memref<2xi32, #tpu.memory_space<smem>>) -> (i32, i32) {
    %c0_i32 = arith.constant 0 : i32
    %c0_i32_0 = arith.constant 0 : i32
    %c0_i32_1 = arith.constant 0 : i32
    return %c0_i32, %c0_i32_0 : i32, i32
  }
  func.func @transform_3(%arg0: i32, %arg1: i32, %arg2: memref<2xi32, #tpu.memory_space<smem>>) -> (i32, i32, i32) {
    %c0 = arith.constant 0 : index
    %0 = memref.load %arg2[%c0] : memref<2xi32, #tpu.memory_space<smem>>
    %c1 = arith.constant 1 : index
    %1 = memref.load %arg2[%c1] : memref<2xi32, #tpu.memory_space<smem>>
    %c1_i32 = arith.constant 1 : i32
    %2 = arith.subi %1, %c1_i32 : i32
    %3 = arith.minsi %arg1, %2 : i32
    %4 = arith.addi %0, %3 : i32
    %c0_i32 = arith.constant 0 : i32
    %c0_i32_0 = arith.constant 0 : i32
    return %arg0, %4, %c0_i32 : i32, i32, i32
  }
  func.func @transform_4(%arg0: i32, %arg1: i32, %arg2: memref<2xi32, #tpu.memory_space<smem>>) -> (i32, i32, i32) {
    %c0_i32 = arith.constant 0 : i32
    %c0_i32_0 = arith.constant 0 : i32
    %c0_i32_1 = arith.constant 0 : i32
    return %arg0, %c0_i32, %c0_i32_0 : i32, i32, i32
  }
}

</mosaic_0001>

<llo_original>
// kernel: branch_1_fun.3
$region0: #{branch_1_fun.3}
  #allocation0 [shape = 'u32[]', space=smem, size = 0x4, offset = 0x4, fixed_abs, tag = 'smem constant byte address 0x4 - core index']
  #allocation1 [shape = 'u32[144,128]{1,0:T(1,128)}', space=vmem, size = 0x12000, scoped, tag = 'internal scratch']
  #allocation2 [shape = 's32[1]{0}', space=sflag, size = 0x4, scoped, tag = 'scoped memory for branch_1_fun.3']
  #allocation3 [shape = 'u8[512]{0}', space=smem, size = 0x200, scoped, tag = 'prefetched SMEM operand 0']
  %s0 = inlined_call_operand.vmem [shape: s32[2], index: 0, kind: input, shape index: {}]
  %s1 = inlined_call_operand.vmem [shape: f32[1,4,16], index: 1, kind: input, shape index: {}]
  %s2 = inlined_call_operand.vmem [shape: f32[16,4], index: 2, kind: input, shape index: {}]
  %s3 = inlined_call_operand.vmem [shape: f32[1,4], index: 3, kind: input, shape index: {}]
  %s4 = inlined_call_operand.vmem [shape: f32[4,16,16], index: 4, kind: input, shape index: {}]
  %s5 = inlined_call_operand.hbm [shape: f32[4,4,4], index: 5, kind: output, shape index: {}]
  %s6 = sld [smem:[#allocation0]]
  $region34: #{branch_1_fun.3} parent=0
    _
  %s8 = ssub.s32 1, %s6
  %s9 = scalar_select 0, %s8, %s6
  %s10 = sshll.u32 %s0, 4
  %s11 = int_to_ptr.vmem [resolvable:$true] %s10
  %13 = dma.vmem_to_smem %s11, 16, [#allocation3], [#allocation2]
  %14 = dma.done [#allocation2], 16
  %15 = sfence
  $region1: #{branch_1_fun.3} parent=0
    #allocation4 [shape = 'u8[8192]{0}', space=vmem, size = 0x2000, scoped, tag = 'output window, operand 0, single buffered']
    #allocation5 [shape = 's32[1]{0}', space=sflag, size = 0x4, scoped, tag = 'scoped memory for branch_1_fun.3']
    %16 = vsyncpa [#allocation5], 0
    // Predicated region
    $region2: #{branch_1_fun.3} parent=1 // pred_check
      _
    $region3: #{branch_1_fun.3} parent=1 // pred_check_branch
      %18 = sbr.rel (0) target = $region5
    $region4: #{branch_1_fun.3} parent=1 // pred_region
      %s19 = sld [smem:[#allocation3]]
      %s20 = sld [smem:[#allocation3 + $0x1]]
      %s21 = ssub.s32 %s20, 1
      %p22 = scmp.lt.s32.totalorder 0, %s21
      %s23 = scalar_select %p22, 0, %s21
      %s24 = sadd.s32 %s19, %s23
      %p25 = scmp.lt.s32.totalorder %s24, 0
      %s26 = scalar_select %p25, %s24, 0
      %s27 = smul.addr %s26, 4
      %s28 = scalar_lea.vmem %s1, %s27
      %s29 = sld [smem:[#allocation3]]
      %s30 = sld [smem:[#allocation3 + $0x1]]
      %s31 = ssub.s32 %s30, 1
      %p32 = scmp.lt.s32.totalorder 0, %s31
      %s33 = scalar_select %p32, 0, %s31
      %s34 = sadd.s32 %s29, %s33
    $region5: #{branch_1_fun.3} parent=1 // pred_fallthru
      _
    // Predicated region
    $region6: #{branch_1_fun.3} parent=1 // pred_check
      _
    $region7: #{branch_1_fun.3} parent=1 // pred_check_branch
      %36 = sbr.rel (0) target = $region9
    $region8: #{branch_1_fun.3} parent=1 // pred_region
      _
    $region9: #{branch_1_fun.3} parent=1 // pred_fallthru
      _
    // Predicated region
    $region10: #{branch_1_fun.3} parent=1 // pred_check
      _
    $region11: #{branch_1_fun.3} parent=1 // pred_check_branch
      %38 = sbr.rel (0) target = $region13
    $region12: #{branch_1_fun.3} parent=1 // pred_region
      _
    $region13: #{branch_1_fun.3} parent=1 // pred_fallthru
      _
    // Predicated region
    $region14: #{branch_1_fun.3} parent=1 // pred_check
      _
    $region15: #{branch_1_fun.3} parent=1 // pred_check_branch
      %40 = sbr.rel (0) target = $region17
    $region16: #{branch_1_fun.3} parent=1 // pred_region
      %s41 = sld [smem:[#allocation3]]
      %s42 = sld [smem:[#allocation3 + $0x1]]
      %s43 = ssub.s32 %s42, 1
      %p44 = scmp.lt.s32.totalorder 0, %s43
      %s45 = scalar_select %p44, 0, %s43
      %s46 = sadd.s32 %s41, %s45
      %s47 = smul.u32 2, %s46
      %p48 = scmp.lt.s32.totalorder %s47, 1
      %s49 = scalar_select %p48, %s47, 1
      %s50 = smul.addr %s49, 8
      %s51 = scalar_lea.vmem %s4, %s50
      %s52 = sld [smem:[#allocation3]]
      %s53 = sld [smem:[#allocation3 + $0x1]]
      %s54 = ssub.s32 %s53, 1
      %p55 = scmp.lt.s32.totalorder 0, %s54
      %s56 = scalar_select %p55, 0, %s54
      %s57 = sadd.s32 %s52, %s56
      %s58 = smul.u32 2, %s57
    $region17: #{branch_1_fun.3} parent=1 // pred_fallthru
      _
    %s59 = sld [smem:[#allocation3]]
    %s60 = sld [smem:[#allocation3 + $0x1]]
    %s61 = ssub.s32 %s60, 1
    %p62 = scmp.lt.s32.totalorder 0, %s61
    %s63 = scalar_select %p62, 0, %s61
    %s64 = sadd.s32 %s59, %s63
    %p65 = scmp.lt.s32.totalorder %s64, 0
    %s66 = scalar_select %p65, %s64, 0
    %s67 = smul.addr %s66, 4
    %s68 = scalar_lea.vmem %s1, %s67
    %s69 = sld [smem:[#allocation3]]
    %s70 = sld [smem:[#allocation3 + $0x1]]
    %s71 = ssub.s32 %s70, 1
    %p72 = scmp.lt.s32.totalorder 0, %s71
    %s73 = scalar_select %p72, 0, %s71
    %s74 = sadd.s32 %s69, %s73
    %s75 = smul.u32 2, %s74
    %p76 = scmp.lt.s32.totalorder %s75, 1
    %s77 = scalar_select %p76, %s75, 1
    %s78 = smul.addr %s77, 8
    %s79 = scalar_lea.vmem %s4, %s78
    %s80 = sld [smem:[#allocation3]]
    %s81 = sld [smem:[#allocation3 + $0x1]]
    %s82 = ssub.s32 %s81, 1
    %p83 = scmp.lt.s32.totalorder 0, %s82
    %s84 = scalar_select %p83, 0, %s82
    %s85 = sadd.s32 %s80, %s84
    %p86 = scmp.lt.s32.totalorder %s85, 0
    %s87 = scalar_select %p86, %s85, 0
    %s88 = smul.addr %s87, 4
    %s89 = scalar_lea.vmem %s1, %s88
    %s90 = sld [smem:[#allocation3]]
    %s91 = sld [smem:[#allocation3 + $0x1]]
    %s92 = ssub.s32 %s91, 1
    %p93 = scmp.lt.s32.totalorder 0, %s92
    %s94 = scalar_select %p93, 0, %s92
    %s95 = sadd.s32 %s90, %s94
    %s96 = sld [smem:[#allocation3]]
    %s97 = sld [smem:[#allocation3 + $0x1]]
    %s98 = ssub.s32 %s97, 1
    %p99 = scmp.lt.s32.totalorder 0, %s98
    %s100 = scalar_select %p99, 0, %s98
    %s101 = sadd.s32 %s96, %s100
    %s102 = smul.u32 2, %s101
    %p103 = scmp.lt.s32.totalorder %s102, 1
    %s104 = scalar_select %p103, %s102, 1
    %s105 = smul.addr %s104, 8
    %s106 = scalar_lea.vmem %s4, %s105
    %s107 = sld [smem:[#allocation3]]
    %s108 = sld [smem:[#allocation3 + $0x1]]
    %s109 = ssub.s32 %s108, 1
    %p110 = scmp.lt.s32.totalorder 0, %s109
    %s111 = scalar_select %p110, 0, %s109
    %s112 = sadd.s32 %s107, %s111
    %s113 = smul.u32 2, %s112
    %p114 = scmp.eq.s32.totalorder 0, 0
    // Predicated region
    $region18: #{branch_1_fun.3} parent=1 // pred_check
      %p115 = pneg %p114
    $region19: #{branch_1_fun.3} parent=1 // pred_check_branch
      %117 = sbr.rel (%p115) target = $region21
    $region20: #{branch_1_fun.3} parent=1 // pred_region
      %vm118 = vcmask 27648
      %119 = vst.msk [vmem:[#allocation4] sm:$0xf] %vm118, 0.0
      %120 = vst.msk [vmem:[#allocation4 + $0x4] sm:$0xf] %vm118, 0.0
      %121 = vst.msk [vmem:[#allocation4 + $0x8] sm:$0xf] %vm118, 0.0
      %122 = vst.msk [vmem:[#allocation4 + $0xc] sm:$0xf] %vm118, 0.0
    $region21: #{branch_1_fun.3} parent=1 // pred_fallthru
      _
    %s123 = sld [smem:[#allocation3 + $0x1]]
    %p124 = scmp.lt.s32.totalorder 0, %s123
    // Predicated region
    $region22: #{branch_1_fun.3} parent=1 // pred_check
      %p125 = pneg %p124
    $region23: #{branch_1_fun.3} parent=1 // pred_check_branch
      %127 = sbr.rel (%p125) target = $region25
    $region24: #{branch_1_fun.3} parent=1 // pred_region
      %v128 = vld [vmem:[%s106] sm:$0xff]
      %v129 = vld [vmem:[%s106 + $0x8] sm:$0xff]
      %v130 = vld [vmem:[%s106 + $0x10] sm:$0xff]
      %v131 = vld [vmem:[%s106 + $0x18] sm:$0xff]
      %v132 = vld [vmem:[%s106 + $0x20] sm:$0xff]
      %v133 = vld [vmem:[%s106 + $0x28] sm:$0xff]
      %v134 = vld [vmem:[%s106 + $0x30] sm:$0xff]
      %v135 = vld [vmem:[%s106 + $0x38] sm:$0xff]
      %v136 = vld [vmem:[%s2] sm:$0xff]
      %v137 = vld [vmem:[%s2 + $0x8] sm:$0xff]
      %vm138 = vcmask 130048
      %v140 = vsel %vm138, %v128, 0
      %v143 = vsel %vm138, %v129, 0
      %v146 = vsel %vm138, %v130, 0
      %v149 = vsel %vm138, %v131, 0
      %v152 = vsel %vm138, %v132, 0
      %v155 = vsel %vm138, %v133, 0
      %v158 = vsel %vm138, %v134, 0
      %v161 = vsel %vm138, %v135, 0
      %163 = vmatprep.subr.mxu0 0.0
      %164 = vmatpush1.msra.mxu0 0.0
      %165 = vmatprep.subr.mxu0 0.0
      %166 = vmatpush1.msra.mxu0 0.0
      %167 = vmatprep.subr.mxu0 0.0
      %168 = vmatpush1.msra.mxu0 0.0
      %169 = vmatprep.subr.mxu0 0.0
      %170 = vmatpush1.msra.mxu0 0.0
      %171 = vmatprep.subr.mxu0 0.0
      %172 = vmatpush1.msra.mxu0 0.0
      %173 = vmatprep.subr.mxu0 0.0
      %174 = vmatpush1.msra.mxu0 0.0
      %175 = vmatprep.subr.mxu0 0.0
      %176 = vmatpush1.msra.mxu0 0.0
      %177 = vmatprep.subr.mxu0 0.0
      %178 = vmatpush1.msra.mxu0 0.0
      %179 = vmatprep.subr.mxu0 0.0
      %180 = vmatpush1.msra.mxu0 0.0
      %181 = vmatprep.subr.mxu0 0.0
      %182 = vmatpush1.msra.mxu0 0.0
      %183 = vmatprep.subr.mxu0 0.0
      %184 = vmatpush1.msra.mxu0 0.0
      %185 = vmatprep.subr.mxu0 0.0
      %186 = vmatpush1.msra.mxu0 0.0
      %187 = vmatprep.subr.mxu0 0.0
      %188 = vmatpush1.msra.mxu0 0.0
      %189 = vmatprep.subr.mxu0 0.0
      %190 = vmatpush1.msra.mxu0 0.0
      %191 = vmatprep.subr.mxu0 0.0
      %192 = vmatpush1.msra.mxu0 %v137
      %193 = vmatprep.subr.mxu0 0.0
      %194 = vmatpush1.msra.mxu0 %v136
      %195 = vmatprep.subr.mxu0 0.0
      %196 = vmatpush2.msra.mxu0 0.0
      %197 = vmatprep.subr.mxu0 0.0
      %198 = vmatpush2.msra.mxu0 0.0
      %199 = vmatprep.subr.mxu0 0.0
      %200 = vmatpush2.msra.mxu0 0.0
      %201 = vmatprep.subr.mxu0 0.0
      %202 = vmatpush2.msra.mxu0 0.0
      %203 = vmatprep.subr.mxu0 0.0
      %204 = vmatpush2.msra.mxu0 0.0
      %205 = vmatprep.subr.mxu0 0.0
      %206 = vmatpush2.msra.mxu0 0.0
      %207 = vmatprep.subr.mxu0 0.0
      %208 = vmatpush2.msra.mxu0 0.0
      %209 = vmatprep.subr.mxu0 0.0
      %210 = vmatpush2.msra.mxu0 0.0
      %211 = vmatprep.subr.mxu0 0.0
      %212 = vmatpush2.msra.mxu0 0.0
      %213 = vmatprep.subr.mxu0 0.0
      %214 = vmatpush2.msra.mxu0 0.0
      %215 = vmatprep.subr.mxu0 0.0
      %216 = vmatpush2.msra.mxu0 0.0
      %217 = vmatprep.subr.mxu0 0.0
      %218 = vmatpush2.msra.mxu0 0.0
      %219 = vmatprep.subr.mxu0 0.0
      %220 = vmatpush2.msra.mxu0 0.0
      %221 = vmatprep.subr.mxu0 0.0
      %222 = vmatpush2.msra.mxu0 0.0
      %223 = vmatprep.subr.mxu0 0.0
      %224 = vmatpush2.msra.mxu0 0.0
      %225 = vmatprep.subr.mxu0 0.0
      %226 = vmatpush2.msra.mxu0 0.0
      %227 = vmatprep.mubr.f32.mxu0 0.0
      %228 = vmatmul.mubr.f32.gmra.mxu0 %v140
      %v229 = vpop.f32.mrf.mxu0
      %v230 = vadd.f32 0.0, %v229
      %v231 = vpop.f32.mrf.mxu0
      %232 = vmatprep.mubr.f32.mxu0 0.0
      %233 = vmatmul.mubr.f32.gmra.mxu0 %v143
      %v234 = vpop.f32.mrf.mxu0
      %v235 = vadd.f32 0.0, %v234
      %v236 = vpop.f32.mrf.mxu0
      %237 = vmatprep.mubr.f32.mxu0 0.0
      %238 = vmatmul.mubr.f32.gmra.mxu0 %v146
      %v239 = vpop.f32.mrf.mxu0
      %v240 = vadd.f32 0.0, %v239
      %v241 = vpop.f32.mrf.mxu0
      %242 = vmatprep.mubr.f32.mxu0 0.0
      %243 = vmatmul.mubr.f32.gmra.mxu0 %v149
      %v244 = vpop.f32.mrf.mxu0
      %v245 = vadd.f32 0.0, %v244
      %v246 = vpop.f32.mrf.mxu0
      %247 = vmatprep.mubr.f32.mxu0 0.0
      %248 = vmatmul.mubr.f32.gmra.mxu0 %v152
      %v249 = vpop.f32.mrf.mxu0
      %v250 = vadd.f32 0.0, %v249
      %v251 = vpop.f32.mrf.mxu0
      %252 = vmatprep.mubr.f32.mxu0 0.0
      %253 = vmatmul.mubr.f32.gmra.mxu0 %v155
      %v254 = vpop.f32.mrf.mxu0
      %v255 = vadd.f32 0.0, %v254
      %v256 = vpop.f32.mrf.mxu0
      %257 = vmatprep.mubr.f32.mxu0 0.0
      %258 = vmatmul.mubr.f32.gmra.mxu0 %v158
      %v259 = vpop.f32.mrf.mxu0
      %v260 = vadd.f32 0.0, %v259
      %v261 = vpop.f32.mrf.mxu0
      %262 = vmatprep.mubr.f32.mxu0 0.0
      %263 = vmatmul.mubr.f32.gmra.mxu0 %v161
      %v264 = vpop.f32.mrf.mxu0
      %v265 = vadd.f32 0.0, %v264
      %v266 = vpop.f32.mrf.mxu0
      %267 = vdwg.mxu0
      %v268 = vld [vmem:[%s89] sm:$0xf]
      %v270 = vsel %vm138, %v268, 0
      %272 = vmatprep.subr.mxu0 0.0
      %273 = vmatpush1.msra.mxu0 0.0
      %274 = vmatprep.subr.mxu0 0.0
      %275 = vmatpush1.msra.mxu0 0.0
      %276 = vmatprep.subr.mxu0 0.0
      %277 = vmatpush1.msra.mxu0 0.0
      %278 = vmatprep.subr.mxu0 0.0
      %279 = vmatpush1.msra.mxu0 0.0
      %280 = vmatprep.subr.mxu0 0.0
      %281 = vmatpush1.msra.mxu0 0.0
      %282 = vmatprep.subr.mxu0 0.0
      %283 = vmatpush1.msra.mxu0 0.0
      %284 = vmatprep.subr.mxu0 0.0
      %285 = vmatpush1.msra.mxu0 0.0
      %286 = vmatprep.subr.mxu0 0.0
      %287 = vmatpush1.msra.mxu0 0.0
      %288 = vmatprep.subr.mxu0 0.0
      %289 = vmatpush1.msra.mxu0 0.0
      %290 = vmatprep.subr.mxu0 0.0
      %291 = vmatpush1.msra.mxu0 0.0
      %292 = vmatprep.subr.mxu0 0.0
      %293 = vmatpush1.msra.mxu0 0.0
      %294 = vmatprep.subr.mxu0 0.0
      %295 = vmatpush1.msra.mxu0 0.0
      %296 = vmatprep.subr.mxu0 0.0
      %297 = vmatpush1.msra.mxu0 0.0
      %298 = vmatprep.subr.mxu0 0.0
      %299 = vmatpush1.msra.mxu0 0.0
      %300 = vmatprep.subr.mxu0 0.0
      %301 = vmatpush1.msra.mxu0 %v235
      %302 = vmatprep.subr.mxu0 0.0
      %303 = vmatpush1.msra.mxu0 %v230
      %304 = vmatprep.subr.mxu0 0.0
      %305 = vmatpush2.msra.mxu0 0.0
      %306 = vmatprep.subr.mxu0 0.0
      %307 = vmatpush2.msra.mxu0 0.0
      %308 = vmatprep.subr.mxu0 0.0
      %309 = vmatpush2.msra.mxu0 0.0
      %310 = vmatprep.subr.mxu0 0.0
      %311 = vmatpush2.msra.mxu0 0.0
      %312 = vmatprep.subr.mxu0 0.0
      %313 = vmatpush2.msra.mxu0 0.0
      %314 = vmatprep.subr.mxu0 0.0
      %315 = vmatpush2.msra.mxu0 0.0
      %316 = vmatprep.subr.mxu0 0.0
      %317 = vmatpush2.msra.mxu0 0.0
      %318 = vmatprep.subr.mxu0 0.0
      %319 = vmatpush2.msra.mxu0 0.0
      %320 = vmatprep.subr.mxu0 0.0
      %321 = vmatpush2.msra.mxu0 0.0
      %322 = vmatprep.subr.mxu0 0.0
      %323 = vmatpush2.msra.mxu0 0.0
      %324 = vmatprep.subr.mxu0 0.0
      %325 = vmatpush2.msra.mxu0 0.0
      %326 = vmatprep.subr.mxu0 0.0
      %327 = vmatpush2.msra.mxu0 0.0
      %328 = vmatprep.subr.mxu0 0.0
      %329 = vmatpush2.msra.mxu0 0.0
      %330 = vmatprep.subr.mxu0 0.0
      %331 = vmatpush2.msra.mxu0 0.0
      %332 = vmatprep.subr.mxu0 0.0
      %333 = vmatpush2.msra.mxu0 0.0
      %334 = vmatprep.subr.mxu0 0.0
      %335 = vmatpush2.msra.mxu0 0.0
      %336 = vmatprep.mubr.f32.mxu0 0.0
      %337 = vmatmul.mubr.f32.gmra.mxu0 %v270
      %v338 = vpop.f32.mrf.mxu0
      %v339 = vadd.f32 0.0, %v338
      %v340 = vpop.f32.mrf.mxu0
      %341 = vdwg.mxu0
      %342 = vmatprep.subr.mxu0 0.0
      %343 = vmatpush1.msra.mxu0 0.0
      %344 = vmatprep.subr.mxu0 0.0
      %345 = vmatpush1.msra.mxu0 0.0
      %346 = vmatprep.subr.mxu0 0.0
      %347 = vmatpush1.msra.mxu0 0.0
      %348 = vmatprep.subr.mxu0 0.0
      %349 = vmatpush1.msra.mxu0 0.0
      %350 = vmatprep.subr.mxu0 0.0
      %351 = vmatpush1.msra.mxu0 0.0
      %352 = vmatprep.subr.mxu0 0.0
      %353 = vmatpush1.msra.mxu0 0.0
      %354 = vmatprep.subr.mxu0 0.0
      %355 = vmatpush1.msra.mxu0 0.0
      %356 = vmatprep.subr.mxu0 0.0
      %357 = vmatpush1.msra.mxu0 0.0
      %358 = vmatprep.subr.mxu0 0.0
      %359 = vmatpush1.msra.mxu0 0.0
      %360 = vmatprep.subr.mxu0 0.0
      %361 = vmatpush1.msra.mxu0 0.0
      %362 = vmatprep.subr.mxu0 0.0
      %363 = vmatpush1.msra.mxu0 0.0
      %364 = vmatprep.subr.mxu0 0.0
      %365 = vmatpush1.msra.mxu0 0.0
      %366 = vmatprep.subr.mxu0 0.0
      %367 = vmatpush1.msra.mxu0 0.0
      %368 = vmatprep.subr.mxu0 0.0
      %369 = vmatpush1.msra.mxu0 0.0
      %370 = vmatprep.subr.mxu0 0.0
      %371 = vmatpush1.msra.mxu0 %v245
      %372 = vmatprep.subr.mxu0 0.0
      %373 = vmatpush1.msra.mxu0 %v240
      %374 = vmatprep.subr.mxu0 0.0
      %375 = vmatpush2.msra.mxu0 0.0
      %376 = vmatprep.subr.mxu0 0.0
      %377 = vmatpush2.msra.mxu0 0.0
      %378 = vmatprep.subr.mxu0 0.0
      %379 = vmatpush2.msra.mxu0 0.0
      %380 = vmatprep.subr.mxu0 0.0
      %381 = vmatpush2.msra.mxu0 0.0
      %382 = vmatprep.subr.mxu0 0.0
      %383 = vmatpush2.msra.mxu0 0.0
      %384 = vmatprep.subr.mxu0 0.0
      %385 = vmatpush2.msra.mxu0 0.0
      %386 = vmatprep.subr.mxu0 0.0
      %387 = vmatpush2.msra.mxu0 0.0
      %388 = vmatprep.subr.mxu0 0.0
      %389 = vmatpush2.msra.mxu0 0.0
      %390 = vmatprep.subr.mxu0 0.0
      %391 = vmatpush2.msra.mxu0 0.0
      %392 = vmatprep.subr.mxu0 0.0
      %393 = vmatpush2.msra.mxu0 0.0
      %394 = vmatprep.subr.mxu0 0.0
      %395 = vmatpush2.msra.mxu0 0.0
      %396 = vmatprep.subr.mxu0 0.0
      %397 = vmatpush2.msra.mxu0 0.0
      %398 = vmatprep.subr.mxu0 0.0
      %399 = vmatpush2.msra.mxu0 0.0
      %400 = vmatprep.subr.mxu0 0.0
      %401 = vmatpush2.msra.mxu0 0.0
      %402 = vmatprep.subr.mxu0 0.0
      %403 = vmatpush2.msra.mxu0 0.0
      %404 = vmatprep.subr.mxu0 0.0
      %405 = vmatpush2.msra.mxu0 0.0
      %406 = vmatprep.mubr.f32.mxu0 0.0
      %407 = vmatmul.mubr.f32.gmra.mxu0 %v270
      %v408 = vpop.f32.mrf.mxu0
      %v409 = vadd.f32 0.0, %v408
      %v410 = vpop.f32.mrf.mxu0
      %411 = vdwg.mxu0
      %412 = vmatprep.subr.mxu0 0.0
      %413 = vmatpush1.msra.mxu0 0.0
      %414 = vmatprep.subr.mxu0 0.0
      %415 = vmatpush1.msra.mxu0 0.0
      %416 = vmatprep.subr.mxu0 0.0
      %417 = vmatpush1.msra.mxu0 0.0
      %418 = vmatprep.subr.mxu0 0.0
      %419 = vmatpush1.msra.mxu0 0.0
      %420 = vmatprep.subr.mxu0 0.0
      %421 = vmatpush1.msra.mxu0 0.0
      %422 = vmatprep.subr.mxu0 0.0
      %423 = vmatpush1.msra.mxu0 0.0
      %424 = vmatprep.subr.mxu0 0.0
      %425 = vmatpush1.msra.mxu0 0.0
      %426 = vmatprep.subr.mxu0 0.0
      %427 = vmatpush1.msra.mxu0 0.0
      %428 = vmatprep.subr.mxu0 0.0
      %429 = vmatpush1.msra.mxu0 0.0
      %430 = vmatprep.subr.mxu0 0.0
      %431 = vmatpush1.msra.mxu0 0.0
      %432 = vmatprep.subr.mxu0 0.0
      %433 = vmatpush1.msra.mxu0 0.0
      %434 = vmatprep.subr.mxu0 0.0
      %435 = vmatpush1.msra.mxu0 0.0
      %436 = vmatprep.subr.mxu0 0.0
      %437 = vmatpush1.msra.mxu0 0.0
      %438 = vmatprep.subr.mxu0 0.0
      %439 = vmatpush1.msra.mxu0 0.0
      %440 = vmatprep.subr.mxu0 0.0
      %441 = vmatpush1.msra.mxu0 %v255
      %442 = vmatprep.subr.mxu0 0.0
      %443 = vmatpush1.msra.mxu0 %v250
      %444 = vmatprep.subr.mxu0 0.0
      %445 = vmatpush2.msra.mxu0 0.0
      %446 = vmatprep.subr.mxu0 0.0
      %447 = vmatpush2.msra.mxu0 0.0
      %448 = vmatprep.subr.mxu0 0.0
      %449 = vmatpush2.msra.mxu0 0.0
      %450 = vmatprep.subr.mxu0 0.0
      %451 = vmatpush2.msra.mxu0 0.0
      %452 = vmatprep.subr.mxu0 0.0
      %453 = vmatpush2.msra.mxu0 0.0
      %454 = vmatprep.subr.mxu0 0.0
      %455 = vmatpush2.msra.mxu0 0.0
      %456 = vmatprep.subr.mxu0 0.0
      %457 = vmatpush2.msra.mxu0 0.0
      %458 = vmatprep.subr.mxu0 0.0
      %459 = vmatpush2.msra.mxu0 0.0
      %460 = vmatprep.subr.mxu0 0.0
      %461 = vmatpush2.msra.mxu0 0.0
      %462 = vmatprep.subr.mxu0 0.0
      %463 = vmatpush2.msra.mxu0 0.0
      %464 = vmatprep.subr.mxu0 0.0
      %465 = vmatpush2.msra.mxu0 0.0
      %466 = vmatprep.subr.mxu0 0.0
      %467 = vmatpush2.msra.mxu0 0.0
      %468 = vmatprep.subr.mxu0 0.0
      %469 = vmatpush2.msra.mxu0 0.0
      %470 = vmatprep.subr.mxu0 0.0
      %471 = vmatpush2.msra.mxu0 0.0
      %472 = vmatprep.subr.mxu0 0.0
      %473 = vmatpush2.msra.mxu0 0.0
      %474 = vmatprep.subr.mxu0 0.0
      %475 = vmatpush2.msra.mxu0 0.0
      %476 = vmatprep.mubr.f32.mxu0 0.0
      %477 = vmatmul.mubr.f32.gmra.mxu0 %v270
      %v478 = vpop.f32.mrf.mxu0
      %v479 = vadd.f32 0.0, %v478
      %v480 = vpop.f32.mrf.mxu0
      %481 = vdwg.mxu0
      %482 = vmatprep.subr.mxu0 0.0
      %483 = vmatpush1.msra.mxu0 0.0
      %484 = vmatprep.subr.mxu0 0.0
      %485 = vmatpush1.msra.mxu0 0.0
      %486 = vmatprep.subr.mxu0 0.0
      %487 = vmatpush1.msra.mxu0 0.0
      %488 = vmatprep.subr.mxu0 0.0
      %489 = vmatpush1.msra.mxu0 0.0
      %490 = vmatprep.subr.mxu0 0.0
      %491 = vmatpush1.msra.mxu0 0.0
      %492 = vmatprep.subr.mxu0 0.0
      %493 = vmatpush1.msra.mxu0 0.0
      %494 = vmatprep.subr.mxu0 0.0
      %495 = vmatpush1.msra.mxu0 0.0
      %496 = vmatprep.subr.mxu0 0.0
      %497 = vmatpush1.msra.mxu0 0.0
      %498 = vmatprep.subr.mxu0 0.0
      %499 = vmatpush1.msra.mxu0 0.0
      %500 = vmatprep.subr.mxu0 0.0
      %501 = vmatpush1.msra.mxu0 0.0
      %502 = vmatprep.subr.mxu0 0.0
      %503 = vmatpush1.msra.mxu0 0.0
      %504 = vmatprep.subr.mxu0 0.0
      %505 = vmatpush1.msra.mxu0 0.0
      %506 = vmatprep.subr.mxu0 0.0
      %507 = vmatpush1.msra.mxu0 0.0
      %508 = vmatprep.subr.mxu0 0.0
      %509 = vmatpush1.msra.mxu0 0.0
      %510 = vmatprep.subr.mxu0 0.0
      %511 = vmatpush1.msra.mxu0 %v265
      %512 = vmatprep.subr.mxu0 0.0
      %513 = vmatpush1.msra.mxu0 %v260
      %514 = vmatprep.subr.mxu0 0.0
      %515 = vmatpush2.msra.mxu0 0.0
      %516 = vmatprep.subr.mxu0 0.0
      %517 = vmatpush2.msra.mxu0 0.0
      %518 = vmatprep.subr.mxu0 0.0
      %519 = vmatpush2.msra.mxu0 0.0
      %520 = vmatprep.subr.mxu0 0.0
      %521 = vmatpush2.msra.mxu0 0.0
      %522 = vmatprep.subr.mxu0 0.0
      %523 = vmatpush2.msra.mxu0 0.0
      %524 = vmatprep.subr.mxu0 0.0
      %525 = vmatpush2.msra.mxu0 0.0
      %526 = vmatprep.subr.mxu0 0.0
      %527 = vmatpush2.msra.mxu0 0.0
      %528 = vmatprep.subr.mxu0 0.0
      %529 = vmatpush2.msra.mxu0 0.0
      %530 = vmatprep.subr.mxu0 0.0
      %531 = vmatpush2.msra.mxu0 0.0
      %532 = vmatprep.subr.mxu0 0.0
      %533 = vmatpush2.msra.mxu0 0.0
      %534 = vmatprep.subr.mxu0 0.0
      %535 = vmatpush2.msra.mxu0 0.0
      %536 = vmatprep.subr.mxu0 0.0
      %537 = vmatpush2.msra.mxu0 0.0
      %538 = vmatprep.subr.mxu0 0.0
      %539 = vmatpush2.msra.mxu0 0.0
      %540 = vmatprep.subr.mxu0 0.0
      %541 = vmatpush2.msra.mxu0 0.0
      %542 = vmatprep.subr.mxu0 0.0
      %543 = vmatpush2.msra.mxu0 0.0
      %544 = vmatprep.subr.mxu0 0.0
      %545 = vmatpush2.msra.mxu0 0.0
      %546 = vmatprep.mubr.f32.mxu0 0.0
      %547 = vmatmul.mubr.f32.gmra.mxu0 %v270
      %v548 = vpop.f32.mrf.mxu0
      %v549 = vadd.f32 0.0, %v548
      %v550 = vpop.f32.mrf.mxu0
      %551 = vdwg.mxu0
      %v552 = vld [vmem:[#allocation4] sm:$0xf]
      %v553 = vld [vmem:[#allocation4 + $0x4] sm:$0xf]
      %v554 = vld [vmem:[#allocation4 + $0x8] sm:$0xf]
      %v555 = vld [vmem:[#allocation4 + $0xc] sm:$0xf]
      %v556 = vld [vmem:[%s3] sm:$0x1]
      %v558 = vlaneseq
      %v559 = vshrl.u32 %v558, 7
      %v560 = vsub.s32 0, %v559
      %v561 = vrot.slane %v556, %v560
      %v563 = vmul.f32 %v339, %v561
      %v564 = vmul.f32 %v409, %v561
      %v565 = vmul.f32 %v479, %v561
      %v566 = vmul.f32 %v549, %v561
      %v567 = vadd.f32 %v552, %v563
      %v568 = vadd.f32 %v553, %v564
      %v569 = vadd.f32 %v554, %v565
      %v570 = vadd.f32 %v555, %v566
      %vm571 = vcmask 27648
      %572 = vst.msk [vmem:[#allocation4] sm:$0xf] %vm571, %v567
      %573 = vst.msk [vmem:[#allocation4 + $0x4] sm:$0xf] %vm571, %v568
      %574 = vst.msk [vmem:[#allocation4 + $0x8] sm:$0xf] %vm571, %v569
      %575 = vst.msk [vmem:[#allocation4 + $0xc] sm:$0xf] %vm571, %v570
    $region25: #{branch_1_fun.3} parent=1 // pred_fallthru
      _
    // Predicated region
    $region26: #{branch_1_fun.3} parent=1 // pred_check
      _
    $region27: #{branch_1_fun.3} parent=1 // pred_check_branch
      %577 = sbr.rel (0) target = $region29
    $region28: #{branch_1_fun.3} parent=1 // pred_region
      %s579 = ssub.s32 256, 256
      %580 = vsyncadd [#allocation5], %s579
      %s581 = sshll.u32 [#allocation4], 4
      %s582 = int_to_ptr.vmem [resolvable:$true] %s581
      %587 = dma.vmem_to_hbm [thread:$0]  %s582, 256, %s5, [#allocation5], 64, 64, 4
    $region29: #{branch_1_fun.3} parent=1 // pred_fallthru
      _
    // Predicated region
    $region30: #{branch_1_fun.3} parent=1 // pred_check
      _
    $region31: #{branch_1_fun.3} parent=1 // pred_check_branch
      %589 = sbr.rel (0) target = $region33
    $region32: #{branch_1_fun.3} parent=1 // pred_region
      %590 = dma.done [#allocation5], 256
    $region33: #{branch_1_fun.3} parent=1 // pred_fallthru
      _
    %591 = vsyncpa [#allocation5], 1

</llo_original>
